<compile_context>
chip_gen: v7x
topology: tpu7x:2x2x1
jax: 0.10.0
libtpu: 0.0.40
codegen_flags: <defaults>
</compile_context>

<pallas_src>
import functools

import numpy as np
import jax
import jax.numpy as jnp
from jax.experimental import pallas as pl
from jax.experimental.pallas import tpu as pltpu


# ----------------------------------------------------------------------------
# Small helpers.
# ----------------------------------------------------------------------------
def _round_up(n, m):
    return ((n + m - 1) // m) * m


def _cdiv(a, b):
    return (a + b - 1) // b


def _device_kind():
    try:
        return jax.devices()[0].device_kind.lower()
    except Exception:
        return ""


def _mxu_width():
    k = _device_kind()
    return 256 if ("v6" in k or "v7" in k) else 128   # v6e/v7x: 2x256x256 MXU


def _vmem_cap_bytes():
    k = _device_kind()
    if "v7" in k:
        return 52 << 20   # 64 MiB physical per v7x TC -> leave compiler headroom
    return 100 << 20      # v5e / v6e: 128 MiB physical


def _align_feature(dim, mxu):
    step = 256 if (mxu >= 256 and dim >= 256) else 128
    return _round_up(dim, step)


# ----------------------------------------------------------------------------
# Mask construction — exact replica of MADE.update_masks (num_masks=1, seed=0).
# NOTE: the reference module (no nout = k*nin replication step) only admits
# nout == nin; we keep that constraint.
# Returns masks in the PyTorch buffer layout: (out_features, in_features).
# ----------------------------------------------------------------------------
def make_made_masks(nin, hidden_sizes, natural_ordering=False, seed=0):
    L = len(hidden_sizes)
    rng = np.random.RandomState(seed)
    m = {}
    m[-1] = np.arange(nin) if natural_ordering else rng.permutation(nin)
    for l in range(L):
        m[l] = rng.randint(m[l - 1].min(), nin - 1, size=hidden_sizes[l])
    masks = [m[l - 1][:, None] <= m[l][None, :] for l in range(L)]
    masks.append(m[L - 1][:, None] < m[-1][None, :])
    # PyTorch stores mask.astype(uint8).T -> shape (out_features, in_features)
    return [msk.astype(np.float32).T for msk in masks]


# ----------------------------------------------------------------------------
# Fused Pallas kernel: the whole MADE MLP on one batch tile.
# refs = (x_ref, w_0..w_{L-1}, b_0..b_{L-1}, o_ref, xpad_scratch)
#   x_ref : (tile_b, nin_q)   bf16, true feature width (16-aligned)
#   w_i   : (k_i, out_i)      mask pre-folded, pre-transposed, bf16
#   b_i   : (1, out_i)        f32
#   xpad  : (tile_b, k0_p)    f32 VMEM scratch used to lane-pad x for layer 0
# ----------------------------------------------------------------------------
def made_fused_kernel(*refs, n_layers, x_width):
    x_ref = refs[0]
    w_refs = refs[1:1 + n_layers]
    b_refs = refs[1 + n_layers:1 + 2 * n_layers]
    o_ref = refs[1 + 2 * n_layers]
    xpad_ref = refs[2 + 2 * n_layers]

    k0_p = xpad_ref.shape[1]
    tb = xpad_ref.shape[0]

    if x_width == k0_p:
        # Input feature width is already lane-aligned with layer-0's K.
        h = x_ref[...]
    else:
        # Lane-pad the narrow input tile inside VMEM so every matmul operand is
        # fully lane-aligned.  Pad columns are re-zeroed each step (cheap VPU
        # store) so megacore sharding never sees stale scratch contents.
        xpad_ref[:, x_width:] = jnp.zeros((tb, k0_p - x_width), jnp.float32)
        xpad_ref[:, :x_width] = x_ref[...].astype(jnp.float32)
        h = xpad_ref[...]

    for i in range(n_layers):
        w = w_refs[i][...]                                  # (k_i, out_i) bf16
        y = jnp.dot(h.astype(w.dtype), w,                   # MXU, no transpose
                    preferred_element_type=jnp.float32)
        y = y + b_refs[i][...]                              # f32 epilogue
        if i < n_layers - 1:
            y = jnp.maximum(y, 0.0)
        h = y
    o_ref[...] = h.astype(o_ref.dtype)


# ----------------------------------------------------------------------------
# One-time parameter preparation (hoisted out of the per-call path):
# fold static masks into weights, transpose to (in, out), pad feature dims.
# ----------------------------------------------------------------------------
def prepare_made_params(weights, masks, biases, *, matmul_dtype=jnp.bfloat16):
    n_layers = len(weights)
    nin = weights[0].shape[1]
    nout = weights[-1].shape[0]
    mxu = _mxu_width()

    # Padded feature-dim chain: 128-aligned (256 on v6e/v7x for dims >= 256).
    dims = [nin] + [w.shape[0] for w in weights]
    dims_p = [_align_feature(d, mxu) for d in dims]

    ws, bs = [], []
    for i, (w, m, b) in enumerate(zip(weights, masks, biases)):
        wm = (jnp.asarray(m, jnp.float32) * w).T                   # (in, out)
        in_f, out_f = wm.shape
        in_p, out_p = dims_p[i], dims_p[i + 1]
        wp = jnp.zeros((in_p, out_p), jnp.float32).at[:in_f, :out_f].set(wm)
        bp = jnp.zeros((1, out_p), jnp.float32).at[0, :out_f].set(b)
        ws.append(wp.astype(matmul_dtype))
        bs.append(bp)

    return dict(
        ws=ws, bs=bs, nin=nin, nout=nout,
        nin_q=_round_up(nin, 16),      # HBM input width (bf16 sublane pack)
        k0_p=dims_p[0],                # layer-0 K (lane aligned, in-kernel pad)
        nout_p=dims_p[-1],             # lane-dense output width
    )


# ----------------------------------------------------------------------------
# Batch tiling: even division (no fat tail tile), >= 2 grid steps when the
# batch allows it (so "parallel" can shard across v7x's two TCs), 16-row
# alignment for bf16 sublane packing.
# ----------------------------------------------------------------------------
def _choose_batch_tiling(batch, tile_b_max=1024, *, align=16):
    b_al = _round_up(batch, align)
    n_tiles = 2 if b_al >= 2 * align else 1
    n_tiles = max(n_tiles, _cdiv(b_al, tile_b_max))
    tile_b = _round_up(_cdiv(b_al, n_tiles), align)
    b_pad = tile_b * n_tiles
    return tile_b, b_pad


# ----------------------------------------------------------------------------
# Per-call forward: pad/cast the batch, tile it, launch the fused kernel.
# ----------------------------------------------------------------------------
def made_forward(x, params, *, tile_b_max=1024):
    batch, nin = x.shape
    assert nin == params["nin"], "input width must match prepared params"
    ws, bs = params["ws"], params["bs"]
    nin_q, k0_p, nout_p = params["nin_q"], params["k0_p"], params["nout_p"]
    n_layers = len(ws)
    cap = _vmem_cap_bytes()

    param_bytes = (sum(int(w.size) * w.dtype.itemsize for w in ws)
                   + sum(int(b.size) * 4 for b in bs))
    if param_bytes > (2 * cap) // 3:
        # TODO(synk): add a weight-streaming path (grid axis over out-features /
        # pltpu.emit_pipeline per layer) for configs whose folded weights do not
        # fit VMEM-resident.
        raise NotImplementedError(
            "MADE weights too large for the VMEM-resident fused kernel")

    tile_b, b_pad = _choose_batch_tiling(batch, tile_b_max)
    grid = (b_pad // tile_b,)

    # bf16 input at true feature width; batch padded just enough for even
    # tiling (no 128-lane zero blow-up in HBM).
    xb = x.astype(jnp.bfloat16)
    if b_pad != batch or nin_q != nin:
        xb = jnp.zeros((b_pad, nin_q), jnp.bfloat16).at[:batch, :nin].set(xb)

    kernel = functools.partial(made_fused_kernel, n_layers=n_layers,
                               x_width=nin_q)

    def build(single_buffer_params):
        pm = ({"pipeline_mode": pl.Buffered(1)} if single_buffer_params else {})
        in_specs = [pl.BlockSpec((tile_b, nin_q), lambda i: (i, 0))]
        in_specs += [pl.BlockSpec(w.shape, lambda i: (0, 0), **pm) for w in ws]
        in_specs += [pl.BlockSpec(b.shape, lambda i: (0, 0), **pm) for b in bs]
        out_specs = pl.BlockSpec((tile_b, nout_p), lambda i: (i, 0))

        # VMEM budget: double-buffered streamed tiles, resident params (single-
        # or double-buffered), f32 working activations, in-kernel pad scratch.
        param_mult = 1 if single_buffer_params else 2
        io_bytes = 2 * tile_b * nin_q * 2 + 2 * tile_b * nout_p * 4
        act_bytes = 2 * 4 * tile_b * max(w.shape[1] for w in ws)
        scratch_bytes = 4 * tile_b * k0_p
        need = (io_bytes + param_mult * param_bytes + act_bytes
                + scratch_bytes + (2 << 20))
        vmem_limit = int(min(cap, max(need, 16 << 20)))

        return pl.pallas_call(
            kernel,
            out_shape=jax.ShapeDtypeStruct((b_pad, nout_p), jnp.float32),
            grid=grid,
            in_specs=in_specs,
            out_specs=out_specs,
            scratch_shapes=[pltpu.VMEM((tile_b, k0_p), jnp.float32)],
            compiler_params=pltpu.CompilerParams(
                dimension_semantics=("parallel",),
                vmem_limit_bytes=vmem_limit),
        )

    try:
        out_p = build(True)(xb, *ws, *bs)
    except Exception:
        # Fallback if single-buffered resident params (pl.Buffered(1)) are not
        # supported by this Pallas build: default double-buffering.
        out_p = build(False)(xb, *ws, *bs)

    return out_p[:batch, :params["nout"]]


# ----------------------------------------------------------------------------
# Pure-JAX reference (PyTorch-equivalent semantics).
# ----------------------------------------------------------------------------
def made_forward_ref(x, weights, masks, biases, matmul_dtype=jnp.float32):
    n = len(weights)
    h = x
    for i in range(n):
        wm = (masks[i] * weights[i]).T
        y = jnp.dot(h.astype(matmul_dtype), wm.astype(matmul_dtype),
                    preferred_element_type=jnp.float32) + biases[i]
        h = jnp.maximum(y, 0.0) if i < n - 1 else y
    return h


if __name__ == "__main__":
    # Small MADE: nin=16, hidden=[32, 32], nout=nin (required by the reference
    # module's update_masks, which has no nout = k*nin replication step).
    nin = 16
    hidden_sizes = [32, 32]
    nout = nin
    batch = 4

    hs = [nin] + hidden_sizes + [nout]
    masks_np = make_made_masks(nin, hidden_sizes, natural_ordering=False, seed=0)

    # Deterministic parameter init (nn.Linear-style uniform(-1/sqrt(fan_in), ...)).
    key = jax.random.PRNGKey(0)
    weights, biases, masks = [], [], []
    for li, (h0, h1) in enumerate(zip(hs, hs[1:])):
        key, kw, kb = jax.random.split(key, 3)
        bound = 1.0 / np.sqrt(h0)
        weights.append(jax.random.uniform(kw, (h1, h0), jnp.float32, -bound, bound))
        biases.append(jax.random.uniform(kb, (h1,), jnp.float32, -bound, bound))
        masks.append(jnp.asarray(masks_np[li], dtype=jnp.float32))

    key, kx = jax.random.split(key)
    x = jax.random.normal(kx, (batch, nin), dtype=jnp.float32)

    # One-time mask fold / pad (hoisted out of the per-call path).
    params = prepare_made_params(weights, masks, biases)

    out = jax.block_until_ready(made_forward(x, params))

    # Tight check vs a matched-precision (bf16 matmul, f32 accum) reference.
    ref_bf16 = made_forward_ref(x, weights, masks, biases, jnp.bfloat16)
    np.testing.assert_allclose(np.asarray(out), np.asarray(ref_bf16),
                               rtol=1e-3, atol=1e-3)

    # Loose semantic check vs the full-f32 PyTorch-equivalent reference.
    ref_f32 = made_forward_ref(x, weights, masks, biases, jnp.float32)
    np.testing.assert_allclose(np.asarray(out), np.asarray(ref_f32),
                               rtol=1e-1, atol=1e-1)

    print("KERNEL_OK")
</pallas_src>

<mosaic_0001>
module attributes {stable_mosaic.version = 11 : i64} {
  func.func @made_fused_kernel(%arg0: i32, %arg1: memref<16x16xbf16, #tpu.memory_space<vmem>>, %arg2: memref<128x128xbf16, #tpu.memory_space<vmem>>, %arg3: memref<128x128xbf16, #tpu.memory_space<vmem>>, %arg4: memref<128x128xbf16, #tpu.memory_space<vmem>>, %arg5: memref<1x128xf32, #tpu.memory_space<vmem>>, %arg6: memref<1x128xf32, #tpu.memory_space<vmem>>, %arg7: memref<1x128xf32, #tpu.memory_space<vmem>>, %arg8: memref<16x128xf32, #tpu.memory_space<vmem>>, %arg9: memref<16x128xf32, #tpu.memory_space<vmem>>) attributes {dimension_semantics = [#tpu.dimension_semantics<parallel>], iteration_bounds = array<i64: 1>, scalar_prefetch = 0 : i64, scratch_operands = 1 : i64, tpu.core_type = #tpu.core_type<tc>, window_params = [{transform_indices = @transform_0, window_bounds = array<i64: 16, 16>}, {pipeline_mode = #tpu.pipeline_mode<synchronous>, transform_indices = @transform_1, window_bounds = array<i64: 128, 128>}, {pipeline_mode = #tpu.pipeline_mode<synchronous>, transform_indices = @transform_2, window_bounds = array<i64: 128, 128>}, {pipeline_mode = #tpu.pipeline_mode<synchronous>, transform_indices = @transform_3, window_bounds = array<i64: 128, 128>}, {pipeline_mode = #tpu.pipeline_mode<synchronous>, transform_indices = @transform_4, window_bounds = array<i64: 1, 128>}, {pipeline_mode = #tpu.pipeline_mode<synchronous>, transform_indices = @transform_5, window_bounds = array<i64: 1, 128>}, {pipeline_mode = #tpu.pipeline_mode<synchronous>, transform_indices = @transform_6, window_bounds = array<i64: 1, 128>}, {transform_indices = @transform_7, window_bounds = array<i64: 16, 128>}]} {
    %cst = arith.constant 0.000000e+00 : f32
    %0 = vector.broadcast %cst : f32 to vector<16x112xf32>
    %c0 = arith.constant 0 : index
    %c16 = arith.constant 16 : index
    %1 = vector.load %arg9[%c0, %c16] : memref<16x128xf32, #tpu.memory_space<vmem>>, vector<16x112xf32>
    tpu.vector_store %arg9[%c0, %c16], %0 {strides = array<i32>} : memref<16x128xf32, #tpu.memory_space<vmem>>, vector<16x112xf32>,
    %c0_0 = arith.constant 0 : index
    %c0_1 = arith.constant 0 : index
    %2 = vector.load %arg1[%c0_0, %c0_1] : memref<16x16xbf16, #tpu.memory_space<vmem>>, vector<16x16xbf16>
    %3 = arith.extf %2 : vector<16x16xbf16> to vector<16x16xf32>
    %c0_2 = arith.constant 0 : index
    %c0_3 = arith.constant 0 : index
    %4 = vector.load %arg9[%c0_2, %c0_3] : memref<16x128xf32, #tpu.memory_space<vmem>>, vector<16x16xf32>
    tpu.vector_store %arg9[%c0_2, %c0_3], %3 {strides = array<i32>} : memref<16x128xf32, #tpu.memory_space<vmem>>, vector<16x16xf32>,
    %c0_4 = arith.constant 0 : index
    %c0_5 = arith.constant 0 : index
    %5 = vector.load %arg9[%c0_4, %c0_5] : memref<16x128xf32, #tpu.memory_space<vmem>>, vector<16x128xf32>
    %c0_6 = arith.constant 0 : index
    %c0_7 = arith.constant 0 : index
    %6 = vector.load %arg2[%c0_6, %c0_7] : memref<128x128xbf16, #tpu.memory_space<vmem>>, vector<128x128xbf16>
    %7 = arith.truncf %5 : vector<16x128xf32> to vector<16x128xbf16>
    %cst_8 = arith.constant dense<0.000000e+00> : vector<16x128xf32>
    %8 = tpu.matmul %7, %6, %cst_8 {dimension_numbers = #tpu.dot_dimension_numbers<[1], [0], [0], [1], [0, 0, 1, 1], [], []>} : vector<16x128xbf16>, vector<128x128xbf16>, vector<16x128xf32> -> vector<16x128xf32>
    %c0_9 = arith.constant 0 : index
    %c0_10 = arith.constant 0 : index
    %9 = vector.load %arg5[%c0_9, %c0_10] : memref<1x128xf32, #tpu.memory_space<vmem>>, vector<1x128xf32>
    %10 = vector.broadcast %9 : vector<1x128xf32> to vector<16x128xf32>
    %11 = arith.addf %8, %10 : vector<16x128xf32>
    %cst_11 = arith.constant 0.000000e+00 : f32
    %12 = vector.broadcast %cst_11 : f32 to vector<16x128xf32>
    %13 = arith.maximumf %11, %12 : vector<16x128xf32>
    %c0_12 = arith.constant 0 : index
    %c0_13 = arith.constant 0 : index
    %14 = vector.load %arg3[%c0_12, %c0_13] : memref<128x128xbf16, #tpu.memory_space<vmem>>, vector<128x128xbf16>
    %15 = arith.truncf %13 : vector<16x128xf32> to vector<16x128xbf16>
    %cst_14 = arith.constant dense<0.000000e+00> : vector<16x128xf32>
    %16 = tpu.matmul %15, %14, %cst_14 {dimension_numbers = #tpu.dot_dimension_numbers<[1], [0], [0], [1], [0, 0, 1, 1], [], []>} : vector<16x128xbf16>, vector<128x128xbf16>, vector<16x128xf32> -> vector<16x128xf32>
    %c0_15 = arith.constant 0 : index
    %c0_16 = arith.constant 0 : index
    %17 = vector.load %arg6[%c0_15, %c0_16] : memref<1x128xf32, #tpu.memory_space<vmem>>, vector<1x128xf32>
    %18 = vector.broadcast %17 : vector<1x128xf32> to vector<16x128xf32>
    %19 = arith.addf %16, %18 : vector<16x128xf32>
    %cst_17 = arith.constant 0.000000e+00 : f32
    %20 = vector.broadcast %cst_17 : f32 to vector<16x128xf32>
    %21 = arith.maximumf %19, %20 : vector<16x128xf32>
    %c0_18 = arith.constant 0 : index
    %c0_19 = arith.constant 0 : index
    %22 = vector.load %arg4[%c0_18, %c0_19] : memref<128x128xbf16, #tpu.memory_space<vmem>>, vector<128x128xbf16>
    %23 = arith.truncf %21 : vector<16x128xf32> to vector<16x128xbf16>
    %cst_20 = arith.constant dense<0.000000e+00> : vector<16x128xf32>
    %24 = tpu.matmul %23, %22, %cst_20 {dimension_numbers = #tpu.dot_dimension_numbers<[1], [0], [0], [1], [0, 0, 1, 1], [], []>} : vector<16x128xbf16>, vector<128x128xbf16>, vector<16x128xf32> -> vector<16x128xf32>
    %c0_21 = arith.constant 0 : index
    %c0_22 = arith.constant 0 : index
    %25 = vector.load %arg7[%c0_21, %c0_22] : memref<1x128xf32, #tpu.memory_space<vmem>>, vector<1x128xf32>
    %26 = vector.broadcast %25 : vector<1x128xf32> to vector<16x128xf32>
    %27 = arith.addf %24, %26 : vector<16x128xf32>
    %c0_23 = arith.constant 0 : index
    %c0_24 = arith.constant 0 : index
    %28 = vector.load %arg8[%c0_23, %c0_24] : memref<16x128xf32, #tpu.memory_space<vmem>>, vector<16x128xf32>
    tpu.vector_store %arg8[%c0_23, %c0_24], %27 {strides = array<i32>} : memref<16x128xf32, #tpu.memory_space<vmem>>, vector<16x128xf32>,
    return
  }
  func.func @transform_0(%arg0: i32) -> (i32, i32) {
    %c0_i32 = arith.constant 0 : i32
    %c0_i32_0 = arith.constant 0 : i32
    return %arg0, %c0_i32 : i32, i32
  }
  func.func @transform_1(%arg0: i32) -> (i32, i32) {
    %c0_i32 = arith.constant 0 : i32
    %c0_i32_0 = arith.constant 0 : i32
    %c0_i32_1 = arith.constant 0 : i32
    return %c0_i32, %c0_i32_0 : i32, i32
  }
  func.func @transform_2(%arg0: i32) -> (i32, i32) {
    %c0_i32 = arith.constant 0 : i32
    %c0_i32_0 = arith.constant 0 : i32
    %c0_i32_1 = arith.constant 0 : i32
    return %c0_i32, %c0_i32_0 : i32, i32
  }
  func.func @transform_3(%arg0: i32) -> (i32, i32) {
    %c0_i32 = arith.constant 0 : i32
    %c0_i32_0 = arith.constant 0 : i32
    %c0_i32_1 = arith.constant 0 : i32
    return %c0_i32, %c0_i32_0 : i32, i32
  }
  func.func @transform_4(%arg0: i32) -> (i32, i32) {
    %c0_i32 = arith.constant 0 : i32
    %c0_i32_0 = arith.constant 0 : i32
    %c0_i32_1 = arith.constant 0 : i32
    return %c0_i32, %c0_i32_0 : i32, i32
  }
  func.func @transform_5(%arg0: i32) -> (i32, i32) {
    %c0_i32 = arith.constant 0 : i32
    %c0_i32_0 = arith.constant 0 : i32
    %c0_i32_1 = arith.constant 0 : i32
    return %c0_i32, %c0_i32_0 : i32, i32
  }
  func.func @transform_6(%arg0: i32) -> (i32, i32) {
    %c0_i32 = arith.constant 0 : i32
    %c0_i32_0 = arith.constant 0 : i32
    %c0_i32_1 = arith.constant 0 : i32
    return %c0_i32, %c0_i32_0 : i32, i32
  }
  func.func @transform_7(%arg0: i32) -> (i32, i32) {
    %c0_i32 = arith.constant 0 : i32
    %c0_i32_0 = arith.constant 0 : i32
    return %arg0, %c0_i32 : i32, i32
  }
}

module attributes {stable_mosaic.version = 11 : i64} {
  func.func @made_fused_kernel(%arg0: i32, %arg1: memref<16x16xbf16, #tpu.memory_space<vmem>>, %arg2: memref<128x128xbf16, #tpu.memory_space<vmem>>, %arg3: memref<128x128xbf16, #tpu.memory_space<vmem>>, %arg4: memref<128x128xbf16, #tpu.memory_space<vmem>>, %arg5: memref<1x128xf32, #tpu.memory_space<vmem>>, %arg6: memref<1x128xf32, #tpu.memory_space<vmem>>, %arg7: memref<1x128xf32, #tpu.memory_space<vmem>>, %arg8: memref<16x128xf32, #tpu.memory_space<vmem>>, %arg9: memref<16x128xf32, #tpu.memory_space<vmem>>) attributes {dimension_semantics = [#tpu.dimension_semantics<parallel>], iteration_bounds = array<i64: 1>, scalar_prefetch = 0 : i64, scratch_operands = 1 : i64, tpu.core_type = #tpu.core_type<tc>, window_params = [{transform_indices = @transform_0, window_bounds = array<i64: 16, 16>}, {pipeline_mode = #tpu.pipeline_mode<synchronous>, transform_indices = @transform_1, window_bounds = array<i64: 128, 128>}, {pipeline_mode = #tpu.pipeline_mode<synchronous>, transform_indices = @transform_2, window_bounds = array<i64: 128, 128>}, {pipeline_mode = #tpu.pipeline_mode<synchronous>, transform_indices = @transform_3, window_bounds = array<i64: 128, 128>}, {pipeline_mode = #tpu.pipeline_mode<synchronous>, transform_indices = @transform_4, window_bounds = array<i64: 1, 128>}, {pipeline_mode = #tpu.pipeline_mode<synchronous>, transform_indices = @transform_5, window_bounds = array<i64: 1, 128>}, {pipeline_mode = #tpu.pipeline_mode<synchronous>, transform_indices = @transform_6, window_bounds = array<i64: 1, 128>}, {transform_indices = @transform_7, window_bounds = array<i64: 16, 128>}]} {
    %cst = arith.constant 0.000000e+00 : f32
    %0 = vector.broadcast %cst : f32 to vector<16x112xf32>
    %c0 = arith.constant 0 : index
    %c16 = arith.constant 16 : index
    %1 = vector.load %arg9[%c0, %c16] : memref<16x128xf32, #tpu.memory_space<vmem>>, vector<16x112xf32>
    tpu.vector_store %arg9[%c0, %c16], %0 {strides = array<i32>} : memref<16x128xf32, #tpu.memory_space<vmem>>, vector<16x112xf32>,
    %c0_0 = arith.constant 0 : index
    %c0_1 = arith.constant 0 : index
    %2 = vector.load %arg1[%c0_0, %c0_1] : memref<16x16xbf16, #tpu.memory_space<vmem>>, vector<16x16xbf16>
    %3 = arith.extf %2 : vector<16x16xbf16> to vector<16x16xf32>
    %c0_2 = arith.constant 0 : index
    %c0_3 = arith.constant 0 : index
    %4 = vector.load %arg9[%c0_2, %c0_3] : memref<16x128xf32, #tpu.memory_space<vmem>>, vector<16x16xf32>
    tpu.vector_store %arg9[%c0_2, %c0_3], %3 {strides = array<i32>} : memref<16x128xf32, #tpu.memory_space<vmem>>, vector<16x16xf32>,
    %c0_4 = arith.constant 0 : index
    %c0_5 = arith.constant 0 : index
    %5 = vector.load %arg9[%c0_4, %c0_5] : memref<16x128xf32, #tpu.memory_space<vmem>>, vector<16x128xf32>
    %c0_6 = arith.constant 0 : index
    %c0_7 = arith.constant 0 : index
    %6 = vector.load %arg2[%c0_6, %c0_7] : memref<128x128xbf16, #tpu.memory_space<vmem>>, vector<128x128xbf16>
    %7 = arith.truncf %5 : vector<16x128xf32> to vector<16x128xbf16>
    %cst_8 = arith.constant dense<0.000000e+00> : vector<16x128xf32>
    %8 = tpu.matmul %7, %6, %cst_8 {dimension_numbers = #tpu.dot_dimension_numbers<[1], [0], [0], [1], [0, 0, 1, 1], [], []>} : vector<16x128xbf16>, vector<128x128xbf16>, vector<16x128xf32> -> vector<16x128xf32>
    %c0_9 = arith.constant 0 : index
    %c0_10 = arith.constant 0 : index
    %9 = vector.load %arg5[%c0_9, %c0_10] : memref<1x128xf32, #tpu.memory_space<vmem>>, vector<1x128xf32>
    %10 = vector.broadcast %9 : vector<1x128xf32> to vector<16x128xf32>
    %11 = arith.addf %8, %10 : vector<16x128xf32>
    %cst_11 = arith.constant 0.000000e+00 : f32
    %12 = vector.broadcast %cst_11 : f32 to vector<16x128xf32>
    %13 = arith.maximumf %11, %12 : vector<16x128xf32>
    %c0_12 = arith.constant 0 : index
    %c0_13 = arith.constant 0 : index
    %14 = vector.load %arg3[%c0_12, %c0_13] : memref<128x128xbf16, #tpu.memory_space<vmem>>, vector<128x128xbf16>
    %15 = arith.truncf %13 : vector<16x128xf32> to vector<16x128xbf16>
    %cst_14 = arith.constant dense<0.000000e+00> : vector<16x128xf32>
    %16 = tpu.matmul %15, %14, %cst_14 {dimension_numbers = #tpu.dot_dimension_numbers<[1], [0], [0], [1], [0, 0, 1, 1], [], []>} : vector<16x128xbf16>, vector<128x128xbf16>, vector<16x128xf32> -> vector<16x128xf32>
    %c0_15 = arith.constant 0 : index
    %c0_16 = arith.constant 0 : index
    %17 = vector.load %arg6[%c0_15, %c0_16] : memref<1x128xf32, #tpu.memory_space<vmem>>, vector<1x128xf32>
    %18 = vector.broadcast %17 : vector<1x128xf32> to vector<16x128xf32>
    %19 = arith.addf %16, %18 : vector<16x128xf32>
    %cst_17 = arith.constant 0.000000e+00 : f32
    %20 = vector.broadcast %cst_17 : f32 to vector<16x128xf32>
    %21 = arith.maximumf %19, %20 : vector<16x128xf32>
    %c0_18 = arith.constant 0 : index
    %c0_19 = arith.constant 0 : index
    %22 = vector.load %arg4[%c0_18, %c0_19] : memref<128x128xbf16, #tpu.memory_space<vmem>>, vector<128x128xbf16>
    %23 = arith.truncf %21 : vector<16x128xf32> to vector<16x128xbf16>
    %cst_20 = arith.constant dense<0.000000e+00> : vector<16x128xf32>
    %24 = tpu.matmul %23, %22, %cst_20 {dimension_numbers = #tpu.dot_dimension_numbers<[1], [0], [0], [1], [0, 0, 1, 1], [], []>} : vector<16x128xbf16>, vector<128x128xbf16>, vector<16x128xf32> -> vector<16x128xf32>
    %c0_21 = arith.constant 0 : index
    %c0_22 = arith.constant 0 : index
    %25 = vector.load %arg7[%c0_21, %c0_22] : memref<1x128xf32, #tpu.memory_space<vmem>>, vector<1x128xf32>
    %26 = vector.broadcast %25 : vector<1x128xf32> to vector<16x128xf32>
    %27 = arith.addf %24, %26 : vector<16x128xf32>
    %c0_23 = arith.constant 0 : index
    %c0_24 = arith.constant 0 : index
    %28 = vector.load %arg8[%c0_23, %c0_24] : memref<16x128xf32, #tpu.memory_space<vmem>>, vector<16x128xf32>
    tpu.vector_store %arg8[%c0_23, %c0_24], %27 {strides = array<i32>} : memref<16x128xf32, #tpu.memory_space<vmem>>, vector<16x128xf32>,
    return
  }
  func.func @transform_0(%arg0: i32) -> (i32, i32) {
    %c0_i32 = arith.constant 0 : i32
    %c0_i32_0 = arith.constant 0 : i32
    return %arg0, %c0_i32 : i32, i32
  }
  func.func @transform_1(%arg0: i32) -> (i32, i32) {
    %c0_i32 = arith.constant 0 : i32
    %c0_i32_0 = arith.constant 0 : i32
    %c0_i32_1 = arith.constant 0 : i32
    return %c0_i32, %c0_i32_0 : i32, i32
  }
  func.func @transform_2(%arg0: i32) -> (i32, i32) {
    %c0_i32 = arith.constant 0 : i32
    %c0_i32_0 = arith.constant 0 : i32
    %c0_i32_1 = arith.constant 0 : i32
    return %c0_i32, %c0_i32_0 : i32, i32
  }
  func.func @transform_3(%arg0: i32) -> (i32, i32) {
    %c0_i32 = arith.constant 0 : i32
    %c0_i32_0 = arith.constant 0 : i32
    %c0_i32_1 = arith.constant 0 : i32
    return %c0_i32, %c0_i32_0 : i32, i32
  }
  func.func @transform_4(%arg0: i32) -> (i32, i32) {
    %c0_i32 = arith.constant 0 : i32
    %c0_i32_0 = arith.constant 0 : i32
    %c0_i32_1 = arith.constant 0 : i32
    return %c0_i32, %c0_i32_0 : i32, i32
  }
  func.func @transform_5(%arg0: i32) -> (i32, i32) {
    %c0_i32 = arith.constant 0 : i32
    %c0_i32_0 = arith.constant 0 : i32
    %c0_i32_1 = arith.constant 0 : i32
    return %c0_i32, %c0_i32_0 : i32, i32
  }
  func.func @transform_6(%arg0: i32) -> (i32, i32) {
    %c0_i32 = arith.constant 0 : i32
    %c0_i32_0 = arith.constant 0 : i32
    %c0_i32_1 = arith.constant 0 : i32
    return %c0_i32, %c0_i32_0 : i32, i32
  }
  func.func @transform_7(%arg0: i32) -> (i32, i32) {
    %c0_i32 = arith.constant 0 : i32
    %c0_i32_0 = arith.constant 0 : i32
    return %arg0, %c0_i32 : i32, i32
  }
}

</mosaic_0001>

<llo_original>
// kernel: tpu_custom_call.1
$region0: #{tpu_custom_call.1}
  #allocation0 [shape = 'u32[]', space=smem, size = 0x4, offset = 0x4, fixed_abs, tag = 'smem constant byte address 0x4 - core index']
  #allocation1 [shape = 'u32[144,128]{1,0:T(1,128)}', space=vmem, size = 0x12000, scoped, tag = 'internal scratch']
  #allocation2 [shape = 'f32[16,128]{1,0:T(8,128)}', space=vmem, size = 0x2000, scoped, tag = 'scratch operand']
  %s0 = inlined_call_operand.hbm [shape: bf16[16,16], index: 0, kind: input, shape index: {}]
  %s1 = inlined_call_operand.hbm [shape: bf16[128,128], index: 1, kind: input, shape index: {}]
  %s2 = inlined_call_operand.hbm [shape: bf16[128,128], index: 2, kind: input, shape index: {}]
  %s3 = inlined_call_operand.hbm [shape: bf16[128,128], index: 3, kind: input, shape index: {}]
  %s4 = inlined_call_operand.vmem [shape: f32[1,128], index: 4, kind: input, shape index: {}]
  %s5 = inlined_call_operand.vmem [shape: f32[1,128], index: 5, kind: input, shape index: {}]
  %s6 = inlined_call_operand.vmem [shape: f32[1,128], index: 6, kind: input, shape index: {}]
  %s7 = inlined_call_operand.hbm [shape: f32[16,128], index: 7, kind: output, shape index: {}]
  %s8 = sld [smem:[#allocation0]]
  $region54: #{tpu_custom_call.1} parent=0
    _
  %s10 = ssub.s32 1, %s8
  %s11 = scalar_select 0, %s10, %s8
  $region1: #{tpu_custom_call.1} parent=0
    #allocation3 [shape = 'u8[4096]{0}', space=vmem, size = 0x1000, scoped, tag = 'input window, operand 0, single buffered']
    #allocation4 [shape = 's32[1]{0}', space=sflag, size = 0x4, scoped, tag = 'scoped memory for tpu_custom_call.1']
    #allocation5 [shape = 's32[1]{0}', space=sflag, size = 0x4, scoped, tag = 'scoped memory for tpu_custom_call.1']
    #allocation6 [shape = 'u8[32768]{0}', space=vmem, size = 0x8000, scoped, tag = 'input window, operand 1, single buffered']
    #allocation7 [shape = 's32[1]{0}', space=sflag, size = 0x4, scoped, tag = 'scoped memory for tpu_custom_call.1']
    #allocation8 [shape = 'u8[32768]{0}', space=vmem, size = 0x8000, scoped, tag = 'input window, operand 2, single buffered']
    #allocation9 [shape = 'u8[32768]{0}', space=vmem, size = 0x8000, scoped, tag = 'input window, operand 3, single buffered']
    #allocation10 [shape = 's32[1]{0}', space=sflag, size = 0x4, scoped, tag = 'scoped memory for tpu_custom_call.1']
    #allocation11 [shape = 'u8[8192]{0}', space=vmem, size = 0x2000, scoped, tag = 'output window, operand 0, single buffered']
    %12 = vsyncpa [#allocation4], 0
    %13 = vsyncpa [#allocation7], 0
    %14 = vsyncpa [#allocation10], 0
    %15 = vsyncpa [#allocation5], 0
    // Predicated region
    $region2: #{tpu_custom_call.1} parent=1 // pred_check
      _
    $region3: #{tpu_custom_call.1} parent=1 // pred_check_branch
      %17 = sbr.rel (0) target = $region5
    $region4: #{tpu_custom_call.1} parent=1 // pred_region
      %s19 = ssub.s32 128, 128
      %20 = vsyncadd [#allocation4], %s19
      %s21 = sshll.u32 [#allocation3], 4
      %s22 = int_to_ptr.vmem [resolvable:$true] %s21
      %27 = dma.hbm_to_vmem [thread:$0]  %s0, 128, %s22, [#allocation4], 64, 64, 4
    $region5: #{tpu_custom_call.1} parent=1 // pred_fallthru
      _
    // Predicated region
    $region6: #{tpu_custom_call.1} parent=1 // pred_check
      _
    $region7: #{tpu_custom_call.1} parent=1 // pred_check_branch
      %29 = sbr.rel (0) target = $region9
    $region8: #{tpu_custom_call.1} parent=1 // pred_region
      %s31 = ssub.s32 1024, 1024
      %32 = vsyncadd [#allocation7], %s31
      %s33 = sshll.u32 [#allocation6], 4
      %s34 = int_to_ptr.vmem [resolvable:$true] %s33
      %39 = dma.hbm_to_vmem [thread:$0]  %s1, 1024, %s34, [#allocation7], 64, 64, 4
    $region9: #{tpu_custom_call.1} parent=1 // pred_fallthru
      _
    // Predicated region
    $region10: #{tpu_custom_call.1} parent=1 // pred_check
      _
    $region11: #{tpu_custom_call.1} parent=1 // pred_check_branch
      %41 = sbr.rel (0) target = $region13
    $region12: #{tpu_custom_call.1} parent=1 // pred_region
      %s43 = ssub.s32 1024, 1024
      %44 = vsyncadd [#allocation7], %s43
      %s45 = sshll.u32 [#allocation8], 4
      %s46 = int_to_ptr.vmem [resolvable:$true] %s45
      %51 = dma.hbm_to_vmem [thread:$0]  %s2, 1024, %s46, [#allocation7], 64, 64, 4
    $region13: #{tpu_custom_call.1} parent=1 // pred_fallthru
      _
    // Predicated region
    $region14: #{tpu_custom_call.1} parent=1 // pred_check
      _
    $region15: #{tpu_custom_call.1} parent=1 // pred_check_branch
      %53 = sbr.rel (0) target = $region17
    $region16: #{tpu_custom_call.1} parent=1 // pred_region
      %s55 = ssub.s32 1024, 1024
      %56 = vsyncadd [#allocation10], %s55
      %s57 = sshll.u32 [#allocation9], 4
      %s58 = int_to_ptr.vmem [resolvable:$true] %s57
      %63 = dma.hbm_to_vmem [thread:$0]  %s3, 1024, %s58, [#allocation10], 64, 64, 4
    $region17: #{tpu_custom_call.1} parent=1 // pred_fallthru
      _
    // Predicated region
    $region18: #{tpu_custom_call.1} parent=1 // pred_check
      _
    $region19: #{tpu_custom_call.1} parent=1 // pred_check_branch
      %65 = sbr.rel (0) target = $region21
    $region20: #{tpu_custom_call.1} parent=1 // pred_region
      _
    $region21: #{tpu_custom_call.1} parent=1 // pred_fallthru
      _
    // Predicated region
    $region22: #{tpu_custom_call.1} parent=1 // pred_check
      _
    $region23: #{tpu_custom_call.1} parent=1 // pred_check_branch
      %67 = sbr.rel (0) target = $region25
    $region24: #{tpu_custom_call.1} parent=1 // pred_region
      _
    $region25: #{tpu_custom_call.1} parent=1 // pred_fallthru
      _
    // Predicated region
    $region26: #{tpu_custom_call.1} parent=1 // pred_check
      _
    $region27: #{tpu_custom_call.1} parent=1 // pred_check_branch
      %69 = sbr.rel (0) target = $region29
    $region28: #{tpu_custom_call.1} parent=1 // pred_region
      _
    $region29: #{tpu_custom_call.1} parent=1 // pred_fallthru
      _
    // Predicated region
    $region30: #{tpu_custom_call.1} parent=1 // pred_check
      _
    $region31: #{tpu_custom_call.1} parent=1 // pred_check_branch
      %71 = sbr.rel (0) target = $region33
    $region32: #{tpu_custom_call.1} parent=1 // pred_region
      %72 = dma.done [#allocation4], 128
    $region33: #{tpu_custom_call.1} parent=1 // pred_fallthru
      _
    // Predicated region
    $region34: #{tpu_custom_call.1} parent=1 // pred_check
      _
    $region35: #{tpu_custom_call.1} parent=1 // pred_check_branch
      %74 = sbr.rel (0) target = $region37
    $region36: #{tpu_custom_call.1} parent=1 // pred_region
      %75 = dma.done [#allocation7], 1024
    $region37: #{tpu_custom_call.1} parent=1 // pred_fallthru
      _
    // Predicated region
    $region38: #{tpu_custom_call.1} parent=1 // pred_check
      _
    $region39: #{tpu_custom_call.1} parent=1 // pred_check_branch
      %77 = sbr.rel (0) target = $region41
    $region40: #{tpu_custom_call.1} parent=1 // pred_region
      %78 = dma.done [#allocation7], 1024
    $region41: #{tpu_custom_call.1} parent=1 // pred_fallthru
      _
    // Predicated region
    $region42: #{tpu_custom_call.1} parent=1 // pred_check
      _
    $region43: #{tpu_custom_call.1} parent=1 // pred_check_branch
      %80 = sbr.rel (0) target = $region45
    $region44: #{tpu_custom_call.1} parent=1 // pred_region
      %81 = dma.done [#allocation10], 1024
    $region45: #{tpu_custom_call.1} parent=1 // pred_fallthru
      _
    %vm83 = vcmask 1047680
    %84 = vst.msk [vmem:[#allocation2] sm:$0xff] %vm83, 0.0
    %85 = vst.msk [vmem:[#allocation2 + $0x8] sm:$0xff] %vm83, 0.0
    %v86 = vld [vmem:[#allocation3] sm:$0xf]
    %v87 = vld [vmem:[#allocation3 + $0x4] sm:$0xf]
    %v88 = vunpack.c.l.bf16 %v86
    %v89 = vunpack.c.l.bf16 %v87
    %vm90 = vcmask 130048
    %91 = vst.msk [vmem:[#allocation2] sm:$0xff] %vm90, %v88
    %92 = vst.msk [vmem:[#allocation2 + $0x8] sm:$0xff] %vm90, %v89
    %v93 = vld [vmem:[#allocation2] sm:$0xff]
    %v94 = vld [vmem:[#allocation2 + $0x8] sm:$0xff]
    %v95 = vld [vmem:[#allocation6] sm:$0xf]
    %v96 = vld [vmem:[#allocation6 + $0x4] sm:$0xf]
    %v97 = vld [vmem:[#allocation6 + $0x8] sm:$0xf]
    %v98 = vld [vmem:[#allocation6 + $0xc] sm:$0xf]
    %v99 = vld [vmem:[#allocation6 + $0x10] sm:$0xf]
    %v100 = vld [vmem:[#allocation6 + $0x14] sm:$0xf]
    %v101 = vld [vmem:[#allocation6 + $0x18] sm:$0xf]
    %v102 = vld [vmem:[#allocation6 + $0x1c] sm:$0xf]
    %v103 = vld [vmem:[#allocation6 + $0x20] sm:$0xf]
    %v104 = vld [vmem:[#allocation6 + $0x24] sm:$0xf]
    %v105 = vld [vmem:[#allocation6 + $0x28] sm:$0xf]
    %v106 = vld [vmem:[#allocation6 + $0x2c] sm:$0xf]
    %v107 = vld [vmem:[#allocation6 + $0x30] sm:$0xf]
    %v108 = vld [vmem:[#allocation6 + $0x34] sm:$0xf]
    %v109 = vld [vmem:[#allocation6 + $0x38] sm:$0xf]
    %v110 = vld [vmem:[#allocation6 + $0x3c] sm:$0xf]
    %v111 = vpack.c.bf16 %v94, %v93
    %v112 = vld [vmem:[%s4] sm:$0x1]
    %v114 = vlaneseq
    %v115 = vshrl.u32 %v114, 7
    %v116 = vsub.s32 0, %v115
    %v117 = vrot.slane %v112, %v116
    %v135 = vunpack.c.l.b16 %v95
    %v136 = vunpack.c.l.b16 %v96
    %v137 = vunpack.c.l.b16 %v97
    %v138 = vunpack.c.l.b16 %v98
    %v139 = vunpack.c.l.b16 %v99
    %v140 = vunpack.c.l.b16 %v100
    %v141 = vunpack.c.l.b16 %v101
    %v142 = vunpack.c.l.b16 %v102
    %v143 = vunpack.c.l.b16 %v103
    %v144 = vunpack.c.l.b16 %v104
    %v145 = vunpack.c.l.b16 %v105
    %v146 = vunpack.c.l.b16 %v106
    %v147 = vunpack.c.l.b16 %v107
    %v148 = vunpack.c.l.b16 %v108
    %v149 = vunpack.c.l.b16 %v109
    %v150 = vunpack.c.l.b16 %v110
    %v151 = vpack.c.b16 %v136, %v135
    %v152 = vpack.c.b16 %v138, %v137
    %v153 = vpack.c.b16 %v140, %v139
    %v154 = vpack.c.b16 %v142, %v141
    %v155 = vpack.c.b16 %v144, %v143
    %v156 = vpack.c.b16 %v146, %v145
    %v157 = vpack.c.b16 %v148, %v147
    %v158 = vpack.c.b16 %v150, %v149
    %167 = vmatprep.subr.bf16.mxu0 0
    %168 = vmatpush1.bf16.msra.mxu0 %v151
    %169 = vmatprep.subr.bf16.mxu0 0
    %170 = vmatpush1.bf16.msra.mxu0 %v152
    %171 = vmatprep.subr.bf16.mxu0 0
    %172 = vmatpush1.bf16.msra.mxu0 %v153
    %173 = vmatprep.subr.bf16.mxu0 0
    %174 = vmatpush1.bf16.msra.mxu0 %v154
    %175 = vmatprep.subr.bf16.mxu0 0
    %176 = vmatpush1.bf16.msra.mxu0 %v155
    %177 = vmatprep.subr.bf16.mxu0 0
    %178 = vmatpush1.bf16.msra.mxu0 %v156
    %179 = vmatprep.subr.bf16.mxu0 0
    %180 = vmatpush1.bf16.msra.mxu0 %v157
    %181 = vmatprep.subr.bf16.mxu0 0
    %182 = vmatpush1.bf16.msra.mxu0 %v158
    %183 = vmatprep.subr.bf16.mxu0 0
    %184 = vmatpush1.bf16.msra.mxu0 0
    %185 = vmatprep.subr.bf16.mxu0 0
    %186 = vmatpush1.bf16.msra.mxu0 0
    %187 = vmatprep.subr.bf16.mxu0 0
    %188 = vmatpush1.bf16.msra.mxu0 0
    %189 = vmatprep.subr.bf16.mxu0 0
    %190 = vmatpush1.bf16.msra.mxu0 0
    %191 = vmatprep.subr.bf16.mxu0 0
    %192 = vmatpush1.bf16.msra.mxu0 0
    %193 = vmatprep.subr.bf16.mxu0 0
    %194 = vmatpush1.bf16.msra.mxu0 0
    %195 = vmatprep.subr.bf16.mxu0 0
    %196 = vmatpush1.bf16.msra.mxu0 0
    %197 = vmatprep.subr.bf16.mxu0 0
    %198 = vmatpush1.bf16.msra.mxu0 0
    %199 = vmatprep.mubr.bf16.mxu0 0
    %200 = vmatmul.mubr.bf16.gmra.mrb[0].mxu0 %v111
    %v201 = vpop.f32.mrb[0].mxu0
    %v202 = vadd.f32 %v117, %v201
    %v203 = vpop.f32.mrb[0].mxu0
    %v204 = vpop.f32.mrb[0].mxu0
    %v205 = vadd.f32 %v117, %v204
    %v206 = vpop.f32.mrb[0].mxu0
    %207 = vdwg.mxu0
    %v208 = vmax.f32 %v202, 0.0
    %v209 = vmax.f32 %v205, 0.0
    %v210 = vld [vmem:[#allocation8] sm:$0xf]
    %v211 = vld [vmem:[#allocation8 + $0x4] sm:$0xf]
    %v212 = vld [vmem:[#allocation8 + $0x8] sm:$0xf]
    %v213 = vld [vmem:[#allocation8 + $0xc] sm:$0xf]
    %v214 = vld [vmem:[#allocation8 + $0x10] sm:$0xf]
    %v215 = vld [vmem:[#allocation8 + $0x14] sm:$0xf]
    %v216 = vld [vmem:[#allocation8 + $0x18] sm:$0xf]
    %v217 = vld [vmem:[#allocation8 + $0x1c] sm:$0xf]
    %v218 = vld [vmem:[#allocation8 + $0x20] sm:$0xf]
    %v219 = vld [vmem:[#allocation8 + $0x24] sm:$0xf]
    %v220 = vld [vmem:[#allocation8 + $0x28] sm:$0xf]
    %v221 = vld [vmem:[#allocation8 + $0x2c] sm:$0xf]
    %v222 = vld [vmem:[#allocation8 + $0x30] sm:$0xf]
    %v223 = vld [vmem:[#allocation8 + $0x34] sm:$0xf]
    %v224 = vld [vmem:[#allocation8 + $0x38] sm:$0xf]
    %v225 = vld [vmem:[#allocation8 + $0x3c] sm:$0xf]
    %v226 = vpack.c.bf16 %v209, %v208
    %v227 = vld [vmem:[%s5] sm:$0x1]
    %v229 = vlaneseq
    %v230 = vshrl.u32 %v229, 7
    %v231 = vsub.s32 0, %v230
    %v232 = vrot.slane %v227, %v231
    %v250 = vunpack.c.l.b16 %v210
    %v251 = vunpack.c.l.b16 %v211
    %v252 = vunpack.c.l.b16 %v212
    %v253 = vunpack.c.l.b16 %v213
    %v254 = vunpack.c.l.b16 %v214
    %v255 = vunpack.c.l.b16 %v215
    %v256 = vunpack.c.l.b16 %v216
    %v257 = vunpack.c.l.b16 %v217
    %v258 = vunpack.c.l.b16 %v218
    %v259 = vunpack.c.l.b16 %v219
    %v260 = vunpack.c.l.b16 %v220
    %v261 = vunpack.c.l.b16 %v221
    %v262 = vunpack.c.l.b16 %v222
    %v263 = vunpack.c.l.b16 %v223
    %v264 = vunpack.c.l.b16 %v224
    %v265 = vunpack.c.l.b16 %v225
    %v266 = vpack.c.b16 %v251, %v250
    %v267 = vpack.c.b16 %v253, %v252
    %v268 = vpack.c.b16 %v255, %v254
    %v269 = vpack.c.b16 %v257, %v256
    %v270 = vpack.c.b16 %v259, %v258
    %v271 = vpack.c.b16 %v261, %v260
    %v272 = vpack.c.b16 %v263, %v262
    %v273 = vpack.c.b16 %v265, %v264
    %282 = vmatprep.subr.bf16.mxu0 0
    %283 = vmatpush1.bf16.msra.mxu0 %v266
    %284 = vmatprep.subr.bf16.mxu0 0
    %285 = vmatpush1.bf16.msra.mxu0 %v267
    %286 = vmatprep.subr.bf16.mxu0 0
    %287 = vmatpush1.bf16.msra.mxu0 %v268
    %288 = vmatprep.subr.bf16.mxu0 0
    %289 = vmatpush1.bf16.msra.mxu0 %v269
    %290 = vmatprep.subr.bf16.mxu0 0
    %291 = vmatpush1.bf16.msra.mxu0 %v270
    %292 = vmatprep.subr.bf16.mxu0 0
    %293 = vmatpush1.bf16.msra.mxu0 %v271
    %294 = vmatprep.subr.bf16.mxu0 0
    %295 = vmatpush1.bf16.msra.mxu0 %v272
    %296 = vmatprep.subr.bf16.mxu0 0
    %297 = vmatpush1.bf16.msra.mxu0 %v273
    %298 = vmatprep.subr.bf16.mxu0 0
    %299 = vmatpush1.bf16.msra.mxu0 0
    %300 = vmatprep.subr.bf16.mxu0 0
    %301 = vmatpush1.bf16.msra.mxu0 0
    %302 = vmatprep.subr.bf16.mxu0 0
    %303 = vmatpush1.bf16.msra.mxu0 0
    %304 = vmatprep.subr.bf16.mxu0 0
    %305 = vmatpush1.bf16.msra.mxu0 0
    %306 = vmatprep.subr.bf16.mxu0 0
    %307 = vmatpush1.bf16.msra.mxu0 0
    %308 = vmatprep.subr.bf16.mxu0 0
    %309 = vmatpush1.bf16.msra.mxu0 0
    %310 = vmatprep.subr.bf16.mxu0 0
    %311 = vmatpush1.bf16.msra.mxu0 0
    %312 = vmatprep.subr.bf16.mxu0 0
    %313 = vmatpush1.bf16.msra.mxu0 0
    %314 = vmatprep.mubr.bf16.mxu0 0
    %315 = vmatmul.mubr.bf16.gmra.mrb[0].mxu0 %v226
    %v316 = vpop.f32.mrb[0].mxu0
    %v317 = vadd.f32 %v232, %v316
    %v318 = vpop.f32.mrb[0].mxu0
    %v319 = vpop.f32.mrb[0].mxu0
    %v320 = vadd.f32 %v232, %v319
    %v321 = vpop.f32.mrb[0].mxu0
    %322 = vdwg.mxu0
    %v323 = vmax.f32 %v317, 0.0
    %v324 = vmax.f32 %v320, 0.0
    %v325 = vld [vmem:[#allocation9] sm:$0xf]
    %v326 = vld [vmem:[#allocation9 + $0x4] sm:$0xf]
    %v327 = vld [vmem:[#allocation9 + $0x8] sm:$0xf]
    %v328 = vld [vmem:[#allocation9 + $0xc] sm:$0xf]
    %v329 = vld [vmem:[#allocation9 + $0x10] sm:$0xf]
    %v330 = vld [vmem:[#allocation9 + $0x14] sm:$0xf]
    %v331 = vld [vmem:[#allocation9 + $0x18] sm:$0xf]
    %v332 = vld [vmem:[#allocation9 + $0x1c] sm:$0xf]
    %v333 = vld [vmem:[#allocation9 + $0x20] sm:$0xf]
    %v334 = vld [vmem:[#allocation9 + $0x24] sm:$0xf]
    %v335 = vld [vmem:[#allocation9 + $0x28] sm:$0xf]
    %v336 = vld [vmem:[#allocation9 + $0x2c] sm:$0xf]
    %v337 = vld [vmem:[#allocation9 + $0x30] sm:$0xf]
    %v338 = vld [vmem:[#allocation9 + $0x34] sm:$0xf]
    %v339 = vld [vmem:[#allocation9 + $0x38] sm:$0xf]
    %v340 = vld [vmem:[#allocation9 + $0x3c] sm:$0xf]
    %v341 = vpack.c.bf16 %v324, %v323
    %v342 = vld [vmem:[%s6] sm:$0x1]
    %v344 = vlaneseq
    %v345 = vshrl.u32 %v344, 7
    %v346 = vsub.s32 0, %v345
    %v347 = vrot.slane %v342, %v346
    %v365 = vunpack.c.l.b16 %v325
    %v366 = vunpack.c.l.b16 %v326
    %v367 = vunpack.c.l.b16 %v327
    %v368 = vunpack.c.l.b16 %v328
    %v369 = vunpack.c.l.b16 %v329
    %v370 = vunpack.c.l.b16 %v330
    %v371 = vunpack.c.l.b16 %v331
    %v372 = vunpack.c.l.b16 %v332
    %v373 = vunpack.c.l.b16 %v333
    %v374 = vunpack.c.l.b16 %v334
    %v375 = vunpack.c.l.b16 %v335
    %v376 = vunpack.c.l.b16 %v336
    %v377 = vunpack.c.l.b16 %v337
    %v378 = vunpack.c.l.b16 %v338
    %v379 = vunpack.c.l.b16 %v339
    %v380 = vunpack.c.l.b16 %v340
    %v381 = vpack.c.b16 %v366, %v365
    %v382 = vpack.c.b16 %v368, %v367
    %v383 = vpack.c.b16 %v370, %v369
    %v384 = vpack.c.b16 %v372, %v371
    %v385 = vpack.c.b16 %v374, %v373
    %v386 = vpack.c.b16 %v376, %v375
    %v387 = vpack.c.b16 %v378, %v377
    %v388 = vpack.c.b16 %v380, %v379
    %397 = vmatprep.subr.bf16.mxu0 0
    %398 = vmatpush1.bf16.msra.mxu0 %v381
    %399 = vmatprep.subr.bf16.mxu0 0
    %400 = vmatpush1.bf16.msra.mxu0 %v382
    %401 = vmatprep.subr.bf16.mxu0 0
    %402 = vmatpush1.bf16.msra.mxu0 %v383
    %403 = vmatprep.subr.bf16.mxu0 0
    %404 = vmatpush1.bf16.msra.mxu0 %v384
    %405 = vmatprep.subr.bf16.mxu0 0
    %406 = vmatpush1.bf16.msra.mxu0 %v385
    %407 = vmatprep.subr.bf16.mxu0 0
    %408 = vmatpush1.bf16.msra.mxu0 %v386
    %409 = vmatprep.subr.bf16.mxu0 0
    %410 = vmatpush1.bf16.msra.mxu0 %v387
    %411 = vmatprep.subr.bf16.mxu0 0
    %412 = vmatpush1.bf16.msra.mxu0 %v388
    %413 = vmatprep.subr.bf16.mxu0 0
    %414 = vmatpush1.bf16.msra.mxu0 0
    %415 = vmatprep.subr.bf16.mxu0 0
    %416 = vmatpush1.bf16.msra.mxu0 0
    %417 = vmatprep.subr.bf16.mxu0 0
    %418 = vmatpush1.bf16.msra.mxu0 0
    %419 = vmatprep.subr.bf16.mxu0 0
    %420 = vmatpush1.bf16.msra.mxu0 0
    %421 = vmatprep.subr.bf16.mxu0 0
    %422 = vmatpush1.bf16.msra.mxu0 0
    %423 = vmatprep.subr.bf16.mxu0 0
    %424 = vmatpush1.bf16.msra.mxu0 0
    %425 = vmatprep.subr.bf16.mxu0 0
    %426 = vmatpush1.bf16.msra.mxu0 0
    %427 = vmatprep.subr.bf16.mxu0 0
    %428 = vmatpush1.bf16.msra.mxu0 0
    %429 = vmatprep.mubr.bf16.mxu0 0
    %430 = vmatmul.mubr.bf16.gmra.mrb[0].mxu0 %v341
    %v431 = vpop.f32.mrb[0].mxu0
    %v432 = vadd.f32 %v347, %v431
    %v433 = vpop.f32.mrb[0].mxu0
    %v434 = vpop.f32.mrb[0].mxu0
    %v435 = vadd.f32 %v347, %v434
    %v436 = vpop.f32.mrb[0].mxu0
    %437 = vdwg.mxu0
    %438 = vst [vmem:[#allocation11] sm:$0xff] %v432
    %439 = vst [vmem:[#allocation11 + $0x8] sm:$0xff] %v435
    // Predicated region
    $region46: #{tpu_custom_call.1} parent=1 // pred_check
      _
    $region47: #{tpu_custom_call.1} parent=1 // pred_check_branch
      %441 = sbr.rel (0) target = $region49
    $region48: #{tpu_custom_call.1} parent=1 // pred_region
      %s443 = ssub.s32 256, 256
      %444 = vsyncadd [#allocation5], %s443
      %s445 = sshll.u32 [#allocation11], 4
      %s446 = int_to_ptr.vmem [resolvable:$true] %s445
      %451 = dma.vmem_to_hbm [thread:$0]  %s446, 256, %s7, [#allocation5], 128, 128, 8
    $region49: #{tpu_custom_call.1} parent=1 // pred_fallthru
      _
    // Predicated region
    $region50: #{tpu_custom_call.1} parent=1 // pred_check
      _
    $region51: #{tpu_custom_call.1} parent=1 // pred_check_branch
      %453 = sbr.rel (0) target = $region53
    $region52: #{tpu_custom_call.1} parent=1 // pred_region
      %454 = dma.done [#allocation5], 256
    $region53: #{tpu_custom_call.1} parent=1 // pred_fallthru
      _
    %455 = vsyncpa [#allocation4], 1
    %456 = vsyncpa [#allocation7], 1
    %457 = vsyncpa [#allocation10], 1
    %458 = vsyncpa [#allocation5], 1

// kernel: tpu_custom_call.1
$region0: #{tpu_custom_call.1}
  #allocation0 [shape = 'u32[]', space=smem, size = 0x4, offset = 0x4, fixed_abs, tag = 'smem constant byte address 0x4 - core index']
  #allocation1 [shape = 'u32[144,128]{1,0:T(1,128)}', space=vmem, size = 0x12000, scoped, tag = 'internal scratch']
  #allocation2 [shape = 'f32[16,128]{1,0:T(8,128)}', space=vmem, size = 0x2000, scoped, tag = 'scratch operand']
  %s0 = inlined_call_operand.hbm [shape: bf16[16,16], index: 0, kind: input, shape index: {}]
  %s1 = inlined_call_operand.hbm [shape: bf16[128,128], index: 1, kind: input, shape index: {}]
  %s2 = inlined_call_operand.hbm [shape: bf16[128,128], index: 2, kind: input, shape index: {}]
  %s3 = inlined_call_operand.hbm [shape: bf16[128,128], index: 3, kind: input, shape index: {}]
  %s4 = inlined_call_operand.vmem [shape: f32[1,128], index: 4, kind: input, shape index: {}]
  %s5 = inlined_call_operand.vmem [shape: f32[1,128], index: 5, kind: input, shape index: {}]
  %s6 = inlined_call_operand.vmem [shape: f32[1,128], index: 6, kind: input, shape index: {}]
  %s7 = inlined_call_operand.hbm [shape: f32[16,128], index: 7, kind: output, shape index: {}]
  %s8 = sld [smem:[#allocation0]]
  $region54: #{tpu_custom_call.1} parent=0
    _
  %s10 = ssub.s32 1, %s8
  %s11 = scalar_select 0, %s10, %s8
  $region1: #{tpu_custom_call.1} parent=0
    #allocation3 [shape = 'u8[4096]{0}', space=vmem, size = 0x1000, scoped, tag = 'input window, operand 0, single buffered']
    #allocation4 [shape = 's32[1]{0}', space=sflag, size = 0x4, scoped, tag = 'scoped memory for tpu_custom_call.1']
    #allocation5 [shape = 's32[1]{0}', space=sflag, size = 0x4, scoped, tag = 'scoped memory for tpu_custom_call.1']
    #allocation6 [shape = 'u8[32768]{0}', space=vmem, size = 0x8000, scoped, tag = 'input window, operand 1, single buffered']
    #allocation7 [shape = 's32[1]{0}', space=sflag, size = 0x4, scoped, tag = 'scoped memory for tpu_custom_call.1']
    #allocation8 [shape = 'u8[32768]{0}', space=vmem, size = 0x8000, scoped, tag = 'input window, operand 2, single buffered']
    #allocation9 [shape = 'u8[32768]{0}', space=vmem, size = 0x8000, scoped, tag = 'input window, operand 3, single buffered']
    #allocation10 [shape = 's32[1]{0}', space=sflag, size = 0x4, scoped, tag = 'scoped memory for tpu_custom_call.1']
    #allocation11 [shape = 'u8[8192]{0}', space=vmem, size = 0x2000, scoped, tag = 'output window, operand 0, single buffered']
    %12 = vsyncpa [#allocation4], 0
    %13 = vsyncpa [#allocation7], 0
    %14 = vsyncpa [#allocation10], 0
    %15 = vsyncpa [#allocation5], 0
    // Predicated region
    $region2: #{tpu_custom_call.1} parent=1 // pred_check
      _
    $region3: #{tpu_custom_call.1} parent=1 // pred_check_branch
      %17 = sbr.rel (0) target = $region5
    $region4: #{tpu_custom_call.1} parent=1 // pred_region
      %s19 = ssub.s32 128, 128
      %20 = vsyncadd [#allocation4], %s19
      %s21 = sshll.u32 [#allocation3], 4
      %s22 = int_to_ptr.vmem [resolvable:$true] %s21
      %27 = dma.hbm_to_vmem [thread:$0]  %s0, 128, %s22, [#allocation4], 64, 64, 4
    $region5: #{tpu_custom_call.1} parent=1 // pred_fallthru
      _
    // Predicated region
    $region6: #{tpu_custom_call.1} parent=1 // pred_check
      _
    $region7: #{tpu_custom_call.1} parent=1 // pred_check_branch
      %29 = sbr.rel (0) target = $region9
    $region8: #{tpu_custom_call.1} parent=1 // pred_region
      %s31 = ssub.s32 1024, 1024
      %32 = vsyncadd [#allocation7], %s31
      %s33 = sshll.u32 [#allocation6], 4
      %s34 = int_to_ptr.vmem [resolvable:$true] %s33
      %39 = dma.hbm_to_vmem [thread:$0]  %s1, 1024, %s34, [#allocation7], 64, 64, 4
    $region9: #{tpu_custom_call.1} parent=1 // pred_fallthru
      _
    // Predicated region
    $region10: #{tpu_custom_call.1} parent=1 // pred_check
      _
    $region11: #{tpu_custom_call.1} parent=1 // pred_check_branch
      %41 = sbr.rel (0) target = $region13
    $region12: #{tpu_custom_call.1} parent=1 // pred_region
      %s43 = ssub.s32 1024, 1024
      %44 = vsyncadd [#allocation7], %s43
      %s45 = sshll.u32 [#allocation8], 4
      %s46 = int_to_ptr.vmem [resolvable:$true] %s45
      %51 = dma.hbm_to_vmem [thread:$0]  %s2, 1024, %s46, [#allocation7], 64, 64, 4
    $region13: #{tpu_custom_call.1} parent=1 // pred_fallthru
      _
    // Predicated region
    $region14: #{tpu_custom_call.1} parent=1 // pred_check
      _
    $region15: #{tpu_custom_call.1} parent=1 // pred_check_branch
      %53 = sbr.rel (0) target = $region17
    $region16: #{tpu_custom_call.1} parent=1 // pred_region
      %s55 = ssub.s32 1024, 1024
      %56 = vsyncadd [#allocation10], %s55
      %s57 = sshll.u32 [#allocation9], 4
      %s58 = int_to_ptr.vmem [resolvable:$true] %s57
      %63 = dma.hbm_to_vmem [thread:$0]  %s3, 1024, %s58, [#allocation10], 64, 64, 4
    $region17: #{tpu_custom_call.1} parent=1 // pred_fallthru
      _
    // Predicated region
    $region18: #{tpu_custom_call.1} parent=1 // pred_check
      _
    $region19: #{tpu_custom_call.1} parent=1 // pred_check_branch
      %65 = sbr.rel (0) target = $region21
    $region20: #{tpu_custom_call.1} parent=1 // pred_region
      _
    $region21: #{tpu_custom_call.1} parent=1 // pred_fallthru
      _
    // Predicated region
    $region22: #{tpu_custom_call.1} parent=1 // pred_check
      _
    $region23: #{tpu_custom_call.1} parent=1 // pred_check_branch
      %67 = sbr.rel (0) target = $region25
    $region24: #{tpu_custom_call.1} parent=1 // pred_region
      _
    $region25: #{tpu_custom_call.1} parent=1 // pred_fallthru
      _
    // Predicated region
    $region26: #{tpu_custom_call.1} parent=1 // pred_check
      _
    $region27: #{tpu_custom_call.1} parent=1 // pred_check_branch
      %69 = sbr.rel (0) target = $region29
    $region28: #{tpu_custom_call.1} parent=1 // pred_region
      _
    $region29: #{tpu_custom_call.1} parent=1 // pred_fallthru
      _
    // Predicated region
    $region30: #{tpu_custom_call.1} parent=1 // pred_check
      _
    $region31: #{tpu_custom_call.1} parent=1 // pred_check_branch
      %71 = sbr.rel (0) target = $region33
    $region32: #{tpu_custom_call.1} parent=1 // pred_region
      %72 = dma.done [#allocation4], 128
    $region33: #{tpu_custom_call.1} parent=1 // pred_fallthru
      _
    // Predicated region
    $region34: #{tpu_custom_call.1} parent=1 // pred_check
      _
    $region35: #{tpu_custom_call.1} parent=1 // pred_check_branch
      %74 = sbr.rel (0) target = $region37
    $region36: #{tpu_custom_call.1} parent=1 // pred_region
      %75 = dma.done [#allocation7], 1024
    $region37: #{tpu_custom_call.1} parent=1 // pred_fallthru
      _
    // Predicated region
    $region38: #{tpu_custom_call.1} parent=1 // pred_check
      _
    $region39: #{tpu_custom_call.1} parent=1 // pred_check_branch
      %77 = sbr.rel (0) target = $region41
    $region40: #{tpu_custom_call.1} parent=1 // pred_region
      %78 = dma.done [#allocation7], 1024
    $region41: #{tpu_custom_call.1} parent=1 // pred_fallthru
      _
    // Predicated region
    $region42: #{tpu_custom_call.1} parent=1 // pred_check
      _
    $region43: #{tpu_custom_call.1} parent=1 // pred_check_branch
      %80 = sbr.rel (0) target = $region45
    $region44: #{tpu_custom_call.1} parent=1 // pred_region
      %81 = dma.done [#allocation10], 1024
    $region45: #{tpu_custom_call.1} parent=1 // pred_fallthru
      _
    %vm83 = vcmask 1047680
    %84 = vst.msk [vmem:[#allocation2] sm:$0xff] %vm83, 0.0
    %85 = vst.msk [vmem:[#allocation2 + $0x8] sm:$0xff] %vm83, 0.0
    %v86 = vld [vmem:[#allocation3] sm:$0xf]
    %v87 = vld [vmem:[#allocation3 + $0x4] sm:$0xf]
    %v88 = vunpack.c.l.bf16 %v86
    %v89 = vunpack.c.l.bf16 %v87
    %vm90 = vcmask 130048
    %91 = vst.msk [vmem:[#allocation2] sm:$0xff] %vm90, %v88
    %92 = vst.msk [vmem:[#allocation2 + $0x8] sm:$0xff] %vm90, %v89
    %v93 = vld [vmem:[#allocation2] sm:$0xff]
    %v94 = vld [vmem:[#allocation2 + $0x8] sm:$0xff]
    %v95 = vld [vmem:[#allocation6] sm:$0xf]
    %v96 = vld [vmem:[#allocation6 + $0x4] sm:$0xf]
    %v97 = vld [vmem:[#allocation6 + $0x8] sm:$0xf]
    %v98 = vld [vmem:[#allocation6 + $0xc] sm:$0xf]
    %v99 = vld [vmem:[#allocation6 + $0x10] sm:$0xf]
    %v100 = vld [vmem:[#allocation6 + $0x14] sm:$0xf]
    %v101 = vld [vmem:[#allocation6 + $0x18] sm:$0xf]
    %v102 = vld [vmem:[#allocation6 + $0x1c] sm:$0xf]
    %v103 = vld [vmem:[#allocation6 + $0x20] sm:$0xf]
    %v104 = vld [vmem:[#allocation6 + $0x24] sm:$0xf]
    %v105 = vld [vmem:[#allocation6 + $0x28] sm:$0xf]
    %v106 = vld [vmem:[#allocation6 + $0x2c] sm:$0xf]
    %v107 = vld [vmem:[#allocation6 + $0x30] sm:$0xf]
    %v108 = vld [vmem:[#allocation6 + $0x34] sm:$0xf]
    %v109 = vld [vmem:[#allocation6 + $0x38] sm:$0xf]
    %v110 = vld [vmem:[#allocation6 + $0x3c] sm:$0xf]
    %v111 = vpack.c.bf16 %v94, %v93
    %v112 = vld [vmem:[%s4] sm:$0x1]
    %v114 = vlaneseq
    %v115 = vshrl.u32 %v114, 7
    %v116 = vsub.s32 0, %v115
    %v117 = vrot.slane %v112, %v116
    %v135 = vunpack.c.l.b16 %v95
    %v136 = vunpack.c.l.b16 %v96
    %v137 = vunpack.c.l.b16 %v97
    %v138 = vunpack.c.l.b16 %v98
    %v139 = vunpack.c.l.b16 %v99
    %v140 = vunpack.c.l.b16 %v100
    %v141 = vunpack.c.l.b16 %v101
    %v142 = vunpack.c.l.b16 %v102
    %v143 = vunpack.c.l.b16 %v103
    %v144 = vunpack.c.l.b16 %v104
    %v145 = vunpack.c.l.b16 %v105
    %v146 = vunpack.c.l.b16 %v106
    %v147 = vunpack.c.l.b16 %v107
    %v148 = vunpack.c.l.b16 %v108
    %v149 = vunpack.c.l.b16 %v109
    %v150 = vunpack.c.l.b16 %v110
    %v151 = vpack.c.b16 %v136, %v135
    %v152 = vpack.c.b16 %v138, %v137
    %v153 = vpack.c.b16 %v140, %v139
    %v154 = vpack.c.b16 %v142, %v141
    %v155 = vpack.c.b16 %v144, %v143
    %v156 = vpack.c.b16 %v146, %v145
    %v157 = vpack.c.b16 %v148, %v147
    %v158 = vpack.c.b16 %v150, %v149
    %167 = vmatprep.subr.bf16.mxu0 0
    %168 = vmatpush1.bf16.msra.mxu0 %v151
    %169 = vmatprep.subr.bf16.mxu0 0
    %170 = vmatpush1.bf16.msra.mxu0 %v152
    %171 = vmatprep.subr.bf16.mxu0 0
    %172 = vmatpush1.bf16.msra.mxu0 %v153
    %173 = vmatprep.subr.bf16.mxu0 0
    %174 = vmatpush1.bf16.msra.mxu0 %v154
    %175 = vmatprep.subr.bf16.mxu0 0
    %176 = vmatpush1.bf16.msra.mxu0 %v155
    %177 = vmatprep.subr.bf16.mxu0 0
    %178 = vmatpush1.bf16.msra.mxu0 %v156
    %179 = vmatprep.subr.bf16.mxu0 0
    %180 = vmatpush1.bf16.msra.mxu0 %v157
    %181 = vmatprep.subr.bf16.mxu0 0
    %182 = vmatpush1.bf16.msra.mxu0 %v158
    %183 = vmatprep.subr.bf16.mxu0 0
    %184 = vmatpush1.bf16.msra.mxu0 0
    %185 = vmatprep.subr.bf16.mxu0 0
    %186 = vmatpush1.bf16.msra.mxu0 0
    %187 = vmatprep.subr.bf16.mxu0 0
    %188 = vmatpush1.bf16.msra.mxu0 0
    %189 = vmatprep.subr.bf16.mxu0 0
    %190 = vmatpush1.bf16.msra.mxu0 0
    %191 = vmatprep.subr.bf16.mxu0 0
    %192 = vmatpush1.bf16.msra.mxu0 0
    %193 = vmatprep.subr.bf16.mxu0 0
    %194 = vmatpush1.bf16.msra.mxu0 0
    %195 = vmatprep.subr.bf16.mxu0 0
    %196 = vmatpush1.bf16.msra.mxu0 0
    %197 = vmatprep.subr.bf16.mxu0 0
    %198 = vmatpush1.bf16.msra.mxu0 0
    %199 = vmatprep.mubr.bf16.mxu0 0
    %200 = vmatmul.mubr.bf16.gmra.mrb[0].mxu0 %v111
    %v201 = vpop.f32.mrb[0].mxu0
    %v202 = vadd.f32 %v117, %v201
    %v203 = vpop.f32.mrb[0].mxu0
    %v204 = vpop.f32.mrb[0].mxu0
    %v205 = vadd.f32 %v117, %v204
    %v206 = vpop.f32.mrb[0].mxu0
    %207 = vdwg.mxu0
    %v208 = vmax.f32 %v202, 0.0
    %v209 = vmax.f32 %v205, 0.0
    %v210 = vld [vmem:[#allocation8] sm:$0xf]
    %v211 = vld [vmem:[#allocation8 + $0x4] sm:$0xf]
    %v212 = vld [vmem:[#allocation8 + $0x8] sm:$0xf]
    %v213 = vld [vmem:[#allocation8 + $0xc] sm:$0xf]
    %v214 = vld [vmem:[#allocation8 + $0x10] sm:$0xf]
    %v215 = vld [vmem:[#allocation8 + $0x14] sm:$0xf]
    %v216 = vld [vmem:[#allocation8 + $0x18] sm:$0xf]
    %v217 = vld [vmem:[#allocation8 + $0x1c] sm:$0xf]
    %v218 = vld [vmem:[#allocation8 + $0x20] sm:$0xf]
    %v219 = vld [vmem:[#allocation8 + $0x24] sm:$0xf]
    %v220 = vld [vmem:[#allocation8 + $0x28] sm:$0xf]
    %v221 = vld [vmem:[#allocation8 + $0x2c] sm:$0xf]
    %v222 = vld [vmem:[#allocation8 + $0x30] sm:$0xf]
    %v223 = vld [vmem:[#allocation8 + $0x34] sm:$0xf]
    %v224 = vld [vmem:[#allocation8 + $0x38] sm:$0xf]
    %v225 = vld [vmem:[#allocation8 + $0x3c] sm:$0xf]
    %v226 = vpack.c.bf16 %v209, %v208
    %v227 = vld [vmem:[%s5] sm:$0x1]
    %v229 = vlaneseq
    %v230 = vshrl.u32 %v229, 7
    %v231 = vsub.s32 0, %v230
    %v232 = vrot.slane %v227, %v231
    %v250 = vunpack.c.l.b16 %v210
    %v251 = vunpack.c.l.b16 %v211
    %v252 = vunpack.c.l.b16 %v212
    %v253 = vunpack.c.l.b16 %v213
    %v254 = vunpack.c.l.b16 %v214
    %v255 = vunpack.c.l.b16 %v215
    %v256 = vunpack.c.l.b16 %v216
    %v257 = vunpack.c.l.b16 %v217
    %v258 = vunpack.c.l.b16 %v218
    %v259 = vunpack.c.l.b16 %v219
    %v260 = vunpack.c.l.b16 %v220
    %v261 = vunpack.c.l.b16 %v221
    %v262 = vunpack.c.l.b16 %v222
    %v263 = vunpack.c.l.b16 %v223
    %v264 = vunpack.c.l.b16 %v224
    %v265 = vunpack.c.l.b16 %v225
    %v266 = vpack.c.b16 %v251, %v250
    %v267 = vpack.c.b16 %v253, %v252
    %v268 = vpack.c.b16 %v255, %v254
    %v269 = vpack.c.b16 %v257, %v256
    %v270 = vpack.c.b16 %v259, %v258
    %v271 = vpack.c.b16 %v261, %v260
    %v272 = vpack.c.b16 %v263, %v262
    %v273 = vpack.c.b16 %v265, %v264
    %282 = vmatprep.subr.bf16.mxu0 0
    %283 = vmatpush1.bf16.msra.mxu0 %v266
    %284 = vmatprep.subr.bf16.mxu0 0
    %285 = vmatpush1.bf16.msra.mxu0 %v267
    %286 = vmatprep.subr.bf16.mxu0 0
    %287 = vmatpush1.bf16.msra.mxu0 %v268
    %288 = vmatprep.subr.bf16.mxu0 0
    %289 = vmatpush1.bf16.msra.mxu0 %v269
    %290 = vmatprep.subr.bf16.mxu0 0
    %291 = vmatpush1.bf16.msra.mxu0 %v270
    %292 = vmatprep.subr.bf16.mxu0 0
    %293 = vmatpush1.bf16.msra.mxu0 %v271
    %294 = vmatprep.subr.bf16.mxu0 0
    %295 = vmatpush1.bf16.msra.mxu0 %v272
    %296 = vmatprep.subr.bf16.mxu0 0
    %297 = vmatpush1.bf16.msra.mxu0 %v273
    %298 = vmatprep.subr.bf16.mxu0 0
    %299 = vmatpush1.bf16.msra.mxu0 0
    %300 = vmatprep.subr.bf16.mxu0 0
    %301 = vmatpush1.bf16.msra.mxu0 0
    %302 = vmatprep.subr.bf16.mxu0 0
    %303 = vmatpush1.bf16.msra.mxu0 0
    %304 = vmatprep.subr.bf16.mxu0 0
    %305 = vmatpush1.bf16.msra.mxu0 0
    %306 = vmatprep.subr.bf16.mxu0 0
    %307 = vmatpush1.bf16.msra.mxu0 0
    %308 = vmatprep.subr.bf16.mxu0 0
    %309 = vmatpush1.bf16.msra.mxu0 0
    %310 = vmatprep.subr.bf16.mxu0 0
    %311 = vmatpush1.bf16.msra.mxu0 0
    %312 = vmatprep.subr.bf16.mxu0 0
    %313 = vmatpush1.bf16.msra.mxu0 0
    %314 = vmatprep.mubr.bf16.mxu0 0
    %315 = vmatmul.mubr.bf16.gmra.mrb[0].mxu0 %v226
    %v316 = vpop.f32.mrb[0].mxu0
    %v317 = vadd.f32 %v232, %v316
    %v318 = vpop.f32.mrb[0].mxu0
    %v319 = vpop.f32.mrb[0].mxu0
    %v320 = vadd.f32 %v232, %v319
    %v321 = vpop.f32.mrb[0].mxu0
    %322 = vdwg.mxu0
    %v323 = vmax.f32 %v317, 0.0
    %v324 = vmax.f32 %v320, 0.0
    %v325 = vld [vmem:[#allocation9] sm:$0xf]
    %v326 = vld [vmem:[#allocation9 + $0x4] sm:$0xf]
    %v327 = vld [vmem:[#allocation9 + $0x8] sm:$0xf]
    %v328 = vld [vmem:[#allocation9 + $0xc] sm:$0xf]
    %v329 = vld [vmem:[#allocation9 + $0x10] sm:$0xf]
    %v330 = vld [vmem:[#allocation9 + $0x14] sm:$0xf]
    %v331 = vld [vmem:[#allocation9 + $0x18] sm:$0xf]
    %v332 = vld [vmem:[#allocation9 + $0x1c] sm:$0xf]
    %v333 = vld [vmem:[#allocation9 + $0x20] sm:$0xf]
    %v334 = vld [vmem:[#allocation9 + $0x24] sm:$0xf]
    %v335 = vld [vmem:[#allocation9 + $0x28] sm:$0xf]
    %v336 = vld [vmem:[#allocation9 + $0x2c] sm:$0xf]
    %v337 = vld [vmem:[#allocation9 + $0x30] sm:$0xf]
    %v338 = vld [vmem:[#allocation9 + $0x34] sm:$0xf]
    %v339 = vld [vmem:[#allocation9 + $0x38] sm:$0xf]
    %v340 = vld [vmem:[#allocation9 + $0x3c] sm:$0xf]
    %v341 = vpack.c.bf16 %v324, %v323
    %v342 = vld [vmem:[%s6] sm:$0x1]
    %v344 = vlaneseq
    %v345 = vshrl.u32 %v344, 7
    %v346 = vsub.s32 0, %v345
    %v347 = vrot.slane %v342, %v346
    %v365 = vunpack.c.l.b16 %v325
    %v366 = vunpack.c.l.b16 %v326
    %v367 = vunpack.c.l.b16 %v327
    %v368 = vunpack.c.l.b16 %v328
    %v369 = vunpack.c.l.b16 %v329
    %v370 = vunpack.c.l.b16 %v330
    %v371 = vunpack.c.l.b16 %v331
    %v372 = vunpack.c.l.b16 %v332
    %v373 = vunpack.c.l.b16 %v333
    %v374 = vunpack.c.l.b16 %v334
    %v375 = vunpack.c.l.b16 %v335
    %v376 = vunpack.c.l.b16 %v336
    %v377 = vunpack.c.l.b16 %v337
    %v378 = vunpack.c.l.b16 %v338
    %v379 = vunpack.c.l.b16 %v339
    %v380 = vunpack.c.l.b16 %v340
    %v381 = vpack.c.b16 %v366, %v365
    %v382 = vpack.c.b16 %v368, %v367
    %v383 = vpack.c.b16 %v370, %v369
    %v384 = vpack.c.b16 %v372, %v371
    %v385 = vpack.c.b16 %v374, %v373
    %v386 = vpack.c.b16 %v376, %v375
    %v387 = vpack.c.b16 %v378, %v377
    %v388 = vpack.c.b16 %v380, %v379
    %397 = vmatprep.subr.bf16.mxu0 0
    %398 = vmatpush1.bf16.msra.mxu0 %v381
    %399 = vmatprep.subr.bf16.mxu0 0
    %400 = vmatpush1.bf16.msra.mxu0 %v382
    %401 = vmatprep.subr.bf16.mxu0 0
    %402 = vmatpush1.bf16.msra.mxu0 %v383
    %403 = vmatprep.subr.bf16.mxu0 0
    %404 = vmatpush1.bf16.msra.mxu0 %v384
    %405 = vmatprep.subr.bf16.mxu0 0
    %406 = vmatpush1.bf16.msra.mxu0 %v385
    %407 = vmatprep.subr.bf16.mxu0 0
    %408 = vmatpush1.bf16.msra.mxu0 %v386
    %409 = vmatprep.subr.bf16.mxu0 0
    %410 = vmatpush1.bf16.msra.mxu0 %v387
    %411 = vmatprep.subr.bf16.mxu0 0
    %412 = vmatpush1.bf16.msra.mxu0 %v388
    %413 = vmatprep.subr.bf16.mxu0 0
    %414 = vmatpush1.bf16.msra.mxu0 0
    %415 = vmatprep.subr.bf16.mxu0 0
    %416 = vmatpush1.bf16.msra.mxu0 0
    %417 = vmatprep.subr.bf16.mxu0 0
    %418 = vmatpush1.bf16.msra.mxu0 0
    %419 = vmatprep.subr.bf16.mxu0 0
    %420 = vmatpush1.bf16.msra.mxu0 0
    %421 = vmatprep.subr.bf16.mxu0 0
    %422 = vmatpush1.bf16.msra.mxu0 0
    %423 = vmatprep.subr.bf16.mxu0 0
    %424 = vmatpush1.bf16.msra.mxu0 0
    %425 = vmatprep.subr.bf16.mxu0 0
    %426 = vmatpush1.bf16.msra.mxu0 0
    %427 = vmatprep.subr.bf16.mxu0 0
    %428 = vmatpush1.bf16.msra.mxu0 0
    %429 = vmatprep.mubr.bf16.mxu0 0
    %430 = vmatmul.mubr.bf16.gmra.mrb[0].mxu0 %v341
    %v431 = vpop.f32.mrb[0].mxu0
    %v432 = vadd.f32 %v347, %v431
    %v433 = vpop.f32.mrb[0].mxu0
    %v434 = vpop.f32.mrb[0].mxu0
    %v435 = vadd.f32 %v347, %v434
    %v436 = vpop.f32.mrb[0].mxu0
    %437 = vdwg.mxu0
    %438 = vst [vmem:[#allocation11] sm:$0xff] %v432
    %439 = vst [vmem:[#allocation11 + $0x8] sm:$0xff] %v435
    // Predicated region
    $region46: #{tpu_custom_call.1} parent=1 // pred_check
      _
    $region47: #{tpu_custom_call.1} parent=1 // pred_check_branch
      %441 = sbr.rel (0) target = $region49
    $region48: #{tpu_custom_call.1} parent=1 // pred_region
      %s443 = ssub.s32 256, 256
      %444 = vsyncadd [#allocation5], %s443
      %s445 = sshll.u32 [#allocation11], 4
      %s446 = int_to_ptr.vmem [resolvable:$true] %s445
      %451 = dma.vmem_to_hbm [thread:$0]  %s446, 256, %s7, [#allocation5], 128, 128, 8
    $region49: #{tpu_custom_call.1} parent=1 // pred_fallthru
      _
    // Predicated region
    $region50: #{tpu_custom_call.1} parent=1 // pred_check
      _
    $region51: #{tpu_custom_call.1} parent=1 // pred_check_branch
      %453 = sbr.rel (0) target = $region53
    $region52: #{tpu_custom_call.1} parent=1 // pred_region
      %454 = dma.done [#allocation5], 256
    $region53: #{tpu_custom_call.1} parent=1 // pred_fallthru
      _
    %455 = vsyncpa [#allocation4], 1
    %456 = vsyncpa [#allocation7], 1
    %457 = vsyncpa [#allocation10], 1
    %458 = vsyncpa [#allocation5], 1

</llo_original>
